<compile_context>
chip_gen: v5e
topology: v5e:2x2
jax: 0.10.0
libtpu: 0.0.40
codegen_flags: <defaults>
</compile_context>

<pallas_src>
import math

import jax
import jax.numpy as jnp
from jax import lax
from jax.experimental import pallas as pl
from jax.experimental.pallas import tpu as pltpu

FRAME   = 16                         # modelA frame size (hop == frame -> T1 = L // FRAME)
D_A     = 32                         # modelA feature dim ('x' hidden size)
HID_B   = 32                         # modelB MLP hidden dim
N_HARM  = 8                          # modelB number of harmonics
D_HEADS = N_HARM + 1 + 1 + N_HARM    # amp | total_amp | pitch_ret | harmonic = 18
PR_COL  = N_HARM + 1                 # column index of the (non-squashed) pitch-return head
D_OUT   = D_A + D_HEADS              # 50
D_PAD   = 128                        # lane-dense padded output width (one full lane group)
_LN10   = math.log(10.0)


# ------------------------------ fused kernel ----------------------------------
def _fused_kernel(xf_ref, wA_ref, bA_ref,
                  pitch_ref, loud_ref, w1_ref, b1_ref,
                  wH_ref, bH_ref, o_ref):
    # ---- modelA: framed audio -> features (single MXU matmul) ----
    x1 = (jnp.dot(xf_ref[...], wA_ref[...], preferred_element_type=jnp.float32)
          + bA_ref[...])                                            # [N, D_A]

    # ---- modelB layer 1: K=2 contraction as two VPU broadcast FMAs + ReLU ----
    h = (pitch_ref[...] * w1_ref[0:1, :]
         + loud_ref[...] * w1_ref[1:2, :]
         + b1_ref[...])                                             # [N, HID_B]
    h = jnp.maximum(h, 0.0)

    # ---- modelB heads: ONE matmul over concatenated [wa|wt|wp|wh] ----
    heads = (jnp.dot(h, wH_ref[...], preferred_element_type=jnp.float32)
             + bH_ref[...])                                         # [N, D_HEADS]

    # mod_sigmoid(z) = 2*sigmoid(z)**log(10) + 1e-7
    #               = 2*exp(-log(10)*softplus(-z)) + 1e-7   (fewer transcendentals)
    sp = jnp.maximum(-heads, 0.0) + jnp.log(1.0 + jnp.exp(-jnp.abs(heads)))
    ms = 2.0 * jnp.exp(-_LN10 * sp) + 1e-7

    # pitch-return column passes through raw; amp / total_amp / harmonic are squashed.
    col = lax.broadcasted_iota(jnp.int32, heads.shape, 1)
    heads_out = jnp.where(col == PR_COL, heads, ms)

    # ---- CombineModel concat: build one lane-dense row in vregs, single store ----
    n = x1.shape[0]
    pad = jnp.zeros((n, D_PAD - D_OUT), jnp.float32)
    o_ref[...] = jnp.concatenate([x1, heads_out, pad], axis=-1)     # [N, 128]


# ------------------------------ forward wrapper --------------------------------
def combine_forward(x, pitch, loudness, paramsA, paramsB):
    B, L = x.shape
    T1 = L // FRAME

    # Faithful to the literal PyTorch:
    #   torch.min(torch.tensor([x1.size(1), amplitude_return[1].size(dim=1)]))
    # where amplitude_return[1] has shape (T2, N_HARM), so dim=1 is N_HARM.
    # TODO(synk): upstream almost certainly intended amplitude_return.size(dim=1)
    # (== T2); with the shapes used here both interpretations give the same length.
    trimmed_len = min(T1, N_HARM)
    T = trimmed_len

    # Trace-time glue: frame the waveform and trim everything to T rows.
    xf = x.reshape(B, T1, FRAME)[:, :T, :].reshape(B * T, FRAME)
    p  = pitch[:, :T, :].reshape(B * T, 1)
    l  = loudness[:, :T, :].reshape(B * T, 1)

    # Trace-time fusion of the four head projections into one weight/bias slab.
    wH = jnp.concatenate([paramsB["wa"], paramsB["wt"], paramsB["wp"], paramsB["wh"]], axis=1)
    bH = jnp.concatenate([paramsB["ba"], paramsB["bt"], paramsB["bp"], paramsB["bh"]], axis=1)

    vmem = pl.BlockSpec(memory_space=pltpu.MemorySpace.VMEM)
    out = pl.pallas_call(
        _fused_kernel,
        out_shape=jax.ShapeDtypeStruct((B * T, D_PAD), jnp.float32),
        in_specs=[vmem] * 9,
        out_specs=vmem,
    )(xf, paramsA["w"], paramsA["b"], p, l, paramsB["w1"], paramsB["b1"], wH, bH)

    # Strip lane padding and restore [B, T, D_OUT] (trace-time glue).
    return out[:, :D_OUT].reshape(B, T, D_OUT)


# ------------------------------ pure-JAX reference -----------------------------
def _reference(x, pitch, loudness, paramsA, paramsB):
    B, L = x.shape
    T1 = L // FRAME
    x1 = x.reshape(B, T1, FRAME) @ paramsA["w"] + paramsA["b"]
    inp = jnp.concatenate([pitch, loudness], axis=-1)
    h = jnp.maximum(inp @ paramsB["w1"] + paramsB["b1"], 0.0)

    def mod_sigmoid(z):  # original DDSP formulation
        return 2.0 * jax.nn.sigmoid(z) ** jnp.log(10.0) + 1e-7

    amp  = mod_sigmoid(h @ paramsB["wa"] + paramsB["ba"])
    tamp = mod_sigmoid(h @ paramsB["wt"] + paramsB["bt"])
    pr   = h @ paramsB["wp"] + paramsB["bp"]
    harm = mod_sigmoid(h @ paramsB["wh"] + paramsB["bh"])
    T = min(x1.shape[1], amp.shape[2])  # literal torch semantics (see note above)
    return jnp.concatenate(
        [x1[:, :T], amp[:, :T], tamp[:, :T], pr[:, :T], harm[:, :T]], axis=-1)


# ------------------------------ deterministic params ---------------------------
def init_params():
    k = jax.random.PRNGKey(0)
    ks = jax.random.split(k, 12)
    paramsA = {
        "w": 0.1 * jax.random.normal(ks[0], (FRAME, D_A), jnp.float32),
        "b": 0.1 * jax.random.normal(ks[1], (1, D_A), jnp.float32),
    }
    paramsB = {
        "w1": 0.1 * jax.random.normal(ks[2], (2, HID_B), jnp.float32),
        "b1": 0.1 * jax.random.normal(ks[3], (1, HID_B), jnp.float32),
        "wa": 0.1 * jax.random.normal(ks[4], (HID_B, N_HARM), jnp.float32),
        "ba": 0.1 * jax.random.normal(ks[5], (1, N_HARM), jnp.float32),
        "wt": 0.1 * jax.random.normal(ks[6], (HID_B, 1), jnp.float32),
        "bt": 0.1 * jax.random.normal(ks[7], (1, 1), jnp.float32),
        "wp": 0.1 * jax.random.normal(ks[8], (HID_B, 1), jnp.float32),
        "bp": 0.1 * jax.random.normal(ks[9], (1, 1), jnp.float32),
        "wh": 0.1 * jax.random.normal(ks[10], (HID_B, N_HARM), jnp.float32),
        "bh": 0.1 * jax.random.normal(ks[11], (1, N_HARM), jnp.float32),
    }
    return paramsA, paramsB


if __name__ == "__main__":
    key = jax.random.PRNGKey(0)
    kx, kp, kl = jax.random.split(key, 3)

    B, L, T2 = 2, 128, 10            # T1 = L // FRAME = 8; T2 = 10 (gets trimmed to 8)
    x = jax.random.normal(kx, (B, L), jnp.float32)                    # raw audio
    pitch = jax.random.uniform(kp, (B, T2, 1), jnp.float32) * 4.0 + 3.0
    loudness = jax.random.normal(kl, (B, T2, 1), jnp.float32)

    paramsA, paramsB = init_params()
    out = combine_forward(x, pitch, loudness, paramsA, paramsB)
    out = jax.block_until_ready(out)

    expected_d = D_A + N_HARM + 1 + 1 + N_HARM
    assert out.shape == (B, 8, expected_d), out.shape
    assert bool(jnp.all(jnp.isfinite(out)))

    ref = _reference(x, pitch, loudness, paramsA, paramsB)
    assert ref.shape == out.shape, (ref.shape, out.shape)
    assert bool(jnp.allclose(out, ref, rtol=1e-2, atol=1e-2)), \
        float(jnp.max(jnp.abs(out - ref)))

    print("KERNEL_OK")
</pallas_src>

<mosaic_0001>
module attributes {stable_mosaic.version = 11 : i64} {
  func.func @_fused_kernel(%arg0: memref<16x16xf32, #tpu.memory_space<vmem>>, %arg1: memref<16x32xf32, #tpu.memory_space<vmem>>, %arg2: memref<1x32xf32, #tpu.memory_space<vmem>>, %arg3: memref<16x1xf32, #tpu.memory_space<vmem>>, %arg4: memref<16x1xf32, #tpu.memory_space<vmem>>, %arg5: memref<2x32xf32, #tpu.memory_space<vmem>>, %arg6: memref<1x32xf32, #tpu.memory_space<vmem>>, %arg7: memref<32x18xf32, #tpu.memory_space<vmem>>, %arg8: memref<1x18xf32, #tpu.memory_space<vmem>>, %arg9: memref<16x128xf32, #tpu.memory_space<vmem>>) attributes {dimension_semantics = [], scalar_prefetch = 0 : i64, scratch_operands = 0 : i64, tpu.core_type = #tpu.core_type<tc>} {
    %c0 = arith.constant 0 : index
    %c0_0 = arith.constant 0 : index
    %0 = vector.load %arg0[%c0, %c0_0] : memref<16x16xf32, #tpu.memory_space<vmem>>, vector<16x16xf32>
    %c0_1 = arith.constant 0 : index
    %c0_2 = arith.constant 0 : index
    %1 = vector.load %arg1[%c0_1, %c0_2] : memref<16x32xf32, #tpu.memory_space<vmem>>, vector<16x32xf32>
    %cst = arith.constant dense<0.000000e+00> : vector<16x32xf32>
    %2 = tpu.matmul %0, %1, %cst {dimension_numbers = #tpu.dot_dimension_numbers<[1], [0], [0], [1], [0, 0, 1, 1], [], []>} : vector<16x16xf32>, vector<16x32xf32>, vector<16x32xf32> -> vector<16x32xf32>
    %c0_3 = arith.constant 0 : index
    %c0_4 = arith.constant 0 : index
    %3 = vector.load %arg2[%c0_3, %c0_4] : memref<1x32xf32, #tpu.memory_space<vmem>>, vector<1x32xf32>
    %4 = vector.broadcast %3 : vector<1x32xf32> to vector<16x32xf32>
    %5 = arith.addf %2, %4 : vector<16x32xf32>
    %c0_5 = arith.constant 0 : index
    %c0_6 = arith.constant 0 : index
    %6 = vector.load %arg3[%c0_5, %c0_6] : memref<16x1xf32, #tpu.memory_space<vmem>>, vector<16x1xf32>
    %c0_7 = arith.constant 0 : index
    %c0_8 = arith.constant 0 : index
    %7 = vector.load %arg5[%c0_7, %c0_8] : memref<2x32xf32, #tpu.memory_space<vmem>>, vector<1x32xf32>
    %8 = vector.broadcast %6 : vector<16x1xf32> to vector<16x32xf32>
    %9 = vector.broadcast %7 : vector<1x32xf32> to vector<16x32xf32>
    %10 = arith.mulf %8, %9 : vector<16x32xf32>
    %c0_9 = arith.constant 0 : index
    %c0_10 = arith.constant 0 : index
    %11 = vector.load %arg4[%c0_9, %c0_10] : memref<16x1xf32, #tpu.memory_space<vmem>>, vector<16x1xf32>
    %c1 = arith.constant 1 : index
    %c0_11 = arith.constant 0 : index
    %12 = vector.load %arg5[%c1, %c0_11] : memref<2x32xf32, #tpu.memory_space<vmem>>, vector<1x32xf32>
    %13 = vector.broadcast %11 : vector<16x1xf32> to vector<16x32xf32>
    %14 = vector.broadcast %12 : vector<1x32xf32> to vector<16x32xf32>
    %15 = arith.mulf %13, %14 : vector<16x32xf32>
    %16 = arith.addf %10, %15 : vector<16x32xf32>
    %c0_12 = arith.constant 0 : index
    %c0_13 = arith.constant 0 : index
    %17 = vector.load %arg6[%c0_12, %c0_13] : memref<1x32xf32, #tpu.memory_space<vmem>>, vector<1x32xf32>
    %18 = vector.broadcast %17 : vector<1x32xf32> to vector<16x32xf32>
    %19 = arith.addf %16, %18 : vector<16x32xf32>
    %cst_14 = arith.constant 0.000000e+00 : f32
    %20 = vector.broadcast %cst_14 : f32 to vector<16x32xf32>
    %21 = arith.maximumf %19, %20 : vector<16x32xf32>
    %c0_15 = arith.constant 0 : index
    %c0_16 = arith.constant 0 : index
    %22 = vector.load %arg7[%c0_15, %c0_16] : memref<32x18xf32, #tpu.memory_space<vmem>>, vector<32x18xf32>
    %cst_17 = arith.constant dense<0.000000e+00> : vector<16x18xf32>
    %23 = tpu.matmul %21, %22, %cst_17 {dimension_numbers = #tpu.dot_dimension_numbers<[1], [0], [0], [1], [0, 0, 1, 1], [], []>} : vector<16x32xf32>, vector<32x18xf32>, vector<16x18xf32> -> vector<16x18xf32>
    %c0_18 = arith.constant 0 : index
    %c0_19 = arith.constant 0 : index
    %24 = vector.load %arg8[%c0_18, %c0_19] : memref<1x18xf32, #tpu.memory_space<vmem>>, vector<1x18xf32>
    %25 = vector.broadcast %24 : vector<1x18xf32> to vector<16x18xf32>
    %26 = arith.addf %23, %25 : vector<16x18xf32>
    %cst_20 = arith.constant 0.000000e+00 : f32
    %27 = vector.broadcast %cst_20 : f32 to vector<16x18xf32>
    %28 = arith.subf %27, %26 : vector<16x18xf32>
    %cst_21 = arith.constant 0.000000e+00 : f32
    %29 = vector.broadcast %cst_21 : f32 to vector<16x18xf32>
    %30 = arith.maximumf %28, %29 : vector<16x18xf32>
    %31 = math.absf %26 : vector<16x18xf32>
    %cst_22 = arith.constant 0.000000e+00 : f32
    %32 = vector.broadcast %cst_22 : f32 to vector<16x18xf32>
    %33 = arith.subf %32, %31 : vector<16x18xf32>
    %34 = math.exp %33 : vector<16x18xf32>
    %cst_23 = arith.constant 1.000000e+00 : f32
    %35 = vector.broadcast %cst_23 : f32 to vector<16x18xf32>
    %36 = arith.addf %35, %34 : vector<16x18xf32>
    %37 = math.log %36 : vector<16x18xf32>
    %38 = arith.addf %30, %37 : vector<16x18xf32>
    %cst_24 = arith.constant -2.30258512 : f32
    %39 = vector.broadcast %cst_24 : f32 to vector<16x18xf32>
    %40 = arith.mulf %39, %38 : vector<16x18xf32>
    %41 = math.exp %40 : vector<16x18xf32>
    %cst_25 = arith.constant 2.000000e+00 : f32
    %42 = vector.broadcast %cst_25 : f32 to vector<16x18xf32>
    %43 = arith.mulf %42, %41 : vector<16x18xf32>
    %cst_26 = arith.constant 1.000000e-07 : f32
    %44 = vector.broadcast %cst_26 : f32 to vector<16x18xf32>
    %45 = arith.addf %43, %44 : vector<16x18xf32>
    %46 = tpu.iota {dimensions = array<i32: 1>} : vector<16x18xi32>
    %c9_i32 = arith.constant 9 : i32
    %47 = vector.broadcast %c9_i32 : i32 to vector<16x18xi32>
    %48 = arith.cmpi eq, %46, %47 : vector<16x18xi32>
    %49 = arith.select %48, %26, %45 : vector<16x18xi1>, vector<16x18xf32>
    %cst_27 = arith.constant 0.000000e+00 : f32
    %50 = vector.broadcast %cst_27 : f32 to vector<16x78xf32>
    %51 = tpu.concatenate %5, %49, %50 in 1 : vector<16x32xf32>, vector<16x18xf32>, vector<16x78xf32> -> vector<16x128xf32>
    %c0_28 = arith.constant 0 : index
    %c0_29 = arith.constant 0 : index
    %52 = vector.load %arg9[%c0_28, %c0_29] : memref<16x128xf32, #tpu.memory_space<vmem>>, vector<16x128xf32>
    tpu.vector_store %arg9[%c0_28, %c0_29], %51 {strides = array<i32>} : memref<16x128xf32, #tpu.memory_space<vmem>>, vector<16x128xf32>,
    return
  }
}

</mosaic_0001>

<llo_original>
// kernel: tpu_custom_call.1
$region0: #{tpu_custom_call.1}
  #allocation0 [shape = 'u32[]', space=smem, size = 0x4, offset = 0x4, fixed_abs, tag = 'smem constant byte address 0x4 - core index']
  #allocation1 [shape = 'u32[72,128]{1,0:T(1,128)}', space=vmem, size = 0x9000, scoped, tag = 'internal scratch']
  %s0 = inlined_call_operand.vmem [shape: f32[16,16], index: 0, kind: input, shape index: {}]
  %s1 = inlined_call_operand.vmem [shape: f32[16,32], index: 1, kind: input, shape index: {}]
  %s2 = inlined_call_operand.vmem [shape: f32[1,32], index: 2, kind: input, shape index: {}]
  %s3 = inlined_call_operand.vmem [shape: f32[16,1], index: 3, kind: input, shape index: {}]
  %s4 = inlined_call_operand.vmem [shape: f32[16,1], index: 4, kind: input, shape index: {}]
  %s5 = inlined_call_operand.vmem [shape: f32[2,32], index: 5, kind: input, shape index: {}]
  %s6 = inlined_call_operand.vmem [shape: f32[1,32], index: 6, kind: input, shape index: {}]
  %s7 = inlined_call_operand.vmem [shape: f32[32,18], index: 7, kind: input, shape index: {}]
  %s8 = inlined_call_operand.vmem [shape: f32[1,18], index: 8, kind: input, shape index: {}]
  %s9 = inlined_call_operand.hbm [shape: f32[16,128], index: 9, kind: output, shape index: {}]
  %s10 = sld [smem:[#allocation0]]
  $region46: #{tpu_custom_call.1} parent=0
    _
  %s12 = ssub.s32 1, %s10
  %s13 = scalar_select 0, %s12, %s10
  $region1: #{tpu_custom_call.1} parent=0
    #allocation2 [shape = 'u8[8192]{0}', space=vmem, size = 0x2000, scoped, tag = 'output window, operand 0, single buffered']
    #allocation3 [shape = 's32[1]{0}', space=sflag, size = 0x4, scoped, tag = 'scoped memory for tpu_custom_call.1']
    %14 = vsyncpa [#allocation3], 0
    // Predicated region
    $region2: #{tpu_custom_call.1} parent=1 // pred_check
      _
    $region3: #{tpu_custom_call.1} parent=1 // pred_check_branch
      %16 = sbr.rel (0) target = $region5
    $region4: #{tpu_custom_call.1} parent=1 // pred_region
      _
    $region5: #{tpu_custom_call.1} parent=1 // pred_fallthru
      _
    // Predicated region
    $region6: #{tpu_custom_call.1} parent=1 // pred_check
      _
    $region7: #{tpu_custom_call.1} parent=1 // pred_check_branch
      %18 = sbr.rel (0) target = $region9
    $region8: #{tpu_custom_call.1} parent=1 // pred_region
      _
    $region9: #{tpu_custom_call.1} parent=1 // pred_fallthru
      _
    // Predicated region
    $region10: #{tpu_custom_call.1} parent=1 // pred_check
      _
    $region11: #{tpu_custom_call.1} parent=1 // pred_check_branch
      %20 = sbr.rel (0) target = $region13
    $region12: #{tpu_custom_call.1} parent=1 // pred_region
      _
    $region13: #{tpu_custom_call.1} parent=1 // pred_fallthru
      _
    // Predicated region
    $region14: #{tpu_custom_call.1} parent=1 // pred_check
      _
    $region15: #{tpu_custom_call.1} parent=1 // pred_check_branch
      %22 = sbr.rel (0) target = $region17
    $region16: #{tpu_custom_call.1} parent=1 // pred_region
      _
    $region17: #{tpu_custom_call.1} parent=1 // pred_fallthru
      _
    // Predicated region
    $region18: #{tpu_custom_call.1} parent=1 // pred_check
      _
    $region19: #{tpu_custom_call.1} parent=1 // pred_check_branch
      %24 = sbr.rel (0) target = $region21
    $region20: #{tpu_custom_call.1} parent=1 // pred_region
      _
    $region21: #{tpu_custom_call.1} parent=1 // pred_fallthru
      _
    // Predicated region
    $region22: #{tpu_custom_call.1} parent=1 // pred_check
      _
    $region23: #{tpu_custom_call.1} parent=1 // pred_check_branch
      %26 = sbr.rel (0) target = $region25
    $region24: #{tpu_custom_call.1} parent=1 // pred_region
      _
    $region25: #{tpu_custom_call.1} parent=1 // pred_fallthru
      _
    // Predicated region
    $region26: #{tpu_custom_call.1} parent=1 // pred_check
      _
    $region27: #{tpu_custom_call.1} parent=1 // pred_check_branch
      %28 = sbr.rel (0) target = $region29
    $region28: #{tpu_custom_call.1} parent=1 // pred_region
      _
    $region29: #{tpu_custom_call.1} parent=1 // pred_fallthru
      _
    // Predicated region
    $region30: #{tpu_custom_call.1} parent=1 // pred_check
      _
    $region31: #{tpu_custom_call.1} parent=1 // pred_check_branch
      %30 = sbr.rel (0) target = $region33
    $region32: #{tpu_custom_call.1} parent=1 // pred_region
      _
    $region33: #{tpu_custom_call.1} parent=1 // pred_fallthru
      _
    // Predicated region
    $region34: #{tpu_custom_call.1} parent=1 // pred_check
      _
    $region35: #{tpu_custom_call.1} parent=1 // pred_check_branch
      %32 = sbr.rel (0) target = $region37
    $region36: #{tpu_custom_call.1} parent=1 // pred_region
      _
    $region37: #{tpu_custom_call.1} parent=1 // pred_fallthru
      _
    %v33 = vld [vmem:[%s0] sm:$0xff]
    %v34 = vld [vmem:[%s0 + $0x8] sm:$0xff]
    %v35 = vld [vmem:[%s1] sm:$0xff]
    %v36 = vld [vmem:[%s1 + $0x8] sm:$0xff]
    %v37 = vld [vmem:[%s2] sm:$0x1]
    %v39 = vperm.slane %v37, 0
    %vm41 = vcmask 130048
    %v43 = vsel %vm41, %v33, 0
    %v46 = vsel %vm41, %v34, 0
    %48 = vmatpush.msra.mxu0 0.0
    %49 = vmatpush.msra.mxu0 0.0
    %50 = vmatpush.msra.mxu0 0.0
    %51 = vmatpush.msra.mxu0 0.0
    %52 = vmatpush.msra.mxu0 0.0
    %53 = vmatpush.msra.mxu0 0.0
    %54 = vmatpush.msra.mxu0 0.0
    %55 = vmatpush.msra.mxu0 0.0
    %56 = vmatpush.msra.mxu0 0.0
    %57 = vmatpush.msra.mxu0 0.0
    %58 = vmatpush.msra.mxu0 0.0
    %59 = vmatpush.msra.mxu0 0.0
    %60 = vmatpush.msra.mxu0 0.0
    %61 = vmatpush.msra.mxu0 0.0
    %62 = vmatpush.msra.mxu0 %v36
    %63 = vmatpush.msra.mxu0 %v35
    %64 = vmatmul.f32.gmra.mxu0 %v43
    %v65 = vpop.f32.mrf.mxu0
    %v66 = vadd.f32 %v39, %v65
    %67 = vmatmul.f32.gmra.mxu0 %v46
    %v68 = vpop.f32.mrf.mxu0
    %v69 = vadd.f32 %v39, %v68
    %70 = vdwg.mxu0
    %v71 = vld [vmem:[%s3] sm:$0xff]
    %v72 = vld [vmem:[%s3 + $0x8] sm:$0xff]
    %v73 = vld [vmem:[%s5] sm:$0x1]
    %75 = vset.pattern.permute.xlu0 0
    %76 = vperm.xlu0 %75, %v71
    %v77 = vpop.permute.xlu0 %76
    %80 = vset.pattern.permute.xlu0 0
    %81 = vperm.xlu0 %80, %v72
    %v82 = vpop.permute.xlu0 %81
    %v84 = vperm.slane %v73, 0
    %v85 = vmul.f32 %v77, %v84
    %v86 = vmul.f32 %v82, %v84
    %v87 = vld [vmem:[%s4] sm:$0xff]
    %v88 = vld [vmem:[%s4 + $0x8] sm:$0xff]
    %v89 = vld [vmem:[%s5 + $0x1] sm:$0x1]
    %91 = vset.pattern.permute.xlu0 0
    %92 = vperm.xlu0 %91, %v87
    %v93 = vpop.permute.xlu0 %92
    %96 = vset.pattern.permute.xlu0 0
    %97 = vperm.xlu0 %96, %v88
    %v98 = vpop.permute.xlu0 %97
    %v100 = vperm.slane %v89, 0
    %v101 = vmul.f32 %v93, %v100
    %v102 = vmul.f32 %v98, %v100
    %v103 = vadd.f32 %v85, %v101
    %v104 = vadd.f32 %v86, %v102
    %v105 = vld [vmem:[%s6] sm:$0x1]
    %v107 = vperm.slane %v105, 0
    %v109 = vadd.f32 %v103, %v107
    %v110 = vadd.f32 %v104, %v107
    %v111 = vmax.f32 %v109, 0.0
    %v112 = vmax.f32 %v110, 0.0
    %v113 = vld [vmem:[%s7] sm:$0xff]
    %v114 = vld [vmem:[%s7 + $0x8] sm:$0xff]
    %v115 = vld [vmem:[%s7 + $0x10] sm:$0xff]
    %v116 = vld [vmem:[%s7 + $0x18] sm:$0xff]
    %v117 = vld [vmem:[%s8] sm:$0x1]
    %v119 = vperm.slane %v117, 0
    %vm121 = vcmask 261120
    %v123 = vsel %vm121, %v111, 0
    %v126 = vsel %vm121, %v112, 0
    %128 = vmatpush.msra.mxu0 0.0
    %129 = vmatpush.msra.mxu0 0.0
    %130 = vmatpush.msra.mxu0 0.0
    %131 = vmatpush.msra.mxu0 0.0
    %132 = vmatpush.msra.mxu0 0.0
    %133 = vmatpush.msra.mxu0 0.0
    %134 = vmatpush.msra.mxu0 0.0
    %135 = vmatpush.msra.mxu0 0.0
    %136 = vmatpush.msra.mxu0 0.0
    %137 = vmatpush.msra.mxu0 0.0
    %138 = vmatpush.msra.mxu0 0.0
    %139 = vmatpush.msra.mxu0 0.0
    %140 = vmatpush.msra.mxu0 %v116
    %141 = vmatpush.msra.mxu0 %v115
    %142 = vmatpush.msra.mxu0 %v114
    %143 = vmatpush.msra.mxu0 %v113
    %144 = vmatmul.f32.gmra.mxu0 %v123
    %v145 = vpop.f32.mrf.mxu0
    %v146 = vadd.f32 %v119, %v145
    %147 = vmatmul.f32.gmra.mxu0 %v126
    %v148 = vpop.f32.mrf.mxu0
    %v149 = vadd.f32 %v119, %v148
    %150 = vdwg.mxu0
    %v151 = vsub.f32 0.0, %v146
    %v152 = vsub.f32 0.0, %v149
    %v153 = vmax.f32 %v151, 0.0
    %v154 = vmax.f32 %v152, 0.0
    %v155 = vand.u32 2147483647, %v146
    %v156 = vand.u32 2147483647, %v149
    %v157 = vsub.f32 0.0, %v155
    %v158 = vsub.f32 0.0, %v156
    %v159 = vmul.f32 %v157, 1.442695
    %v160 = vpow.pop %v159
    %v161 = vmul.f32 %v158, 1.442695
    %v162 = vpow.pop %v161
    %v163 = vadd.f32 %v160, 1.0
    %v164 = vadd.f32 %v162, 1.0
    %v165 = vlog2.pop %v163
    %v166 = vmul.f32 %v165, 0.6931472
    %v167 = vlog2.pop %v164
    %v168 = vmul.f32 %v167, 0.6931472
    %v169 = vadd.f32 %v153, %v166
    %v170 = vadd.f32 %v154, %v168
    %v171 = vmul.f32 %v169, -2.3025851
    %v172 = vmul.f32 %v170, -2.3025851
    %v173 = vmul.f32 %v171, 1.442695
    %v174 = vpow.pop %v173
    %v175 = vmul.f32 %v172, 1.442695
    %v176 = vpow.pop %v175
    %v177 = vmul.f32 %v174, 2.0
    %v178 = vmul.f32 %v176, 2.0
    %v179 = vadd.f32 %v177, 1e-07
    %v180 = vadd.f32 %v178, 1e-07
    %v181 = vlaneseq
    %v182 = vand.u32 %v181, 127
    %vm183 = vcmp.eq.s32.totalorder %v182, 9
    %v184 = vsel %vm183, %v146, %v179
    %v185 = vsel %vm183, %v149, %v180
    %188 = vrot.lane.b32.xlu0 %v184, 32
    %v189 = vpop.permute.xlu0 %188
    %190 = vrot.lane.b32.xlu0 %v185, 32
    %v191 = vpop.permute.xlu0 %190
    %v194 = vsel %vm121, %v66, %v189
    %v195 = vsel %vm121, %v69, %v191
    %vm196 = vcmask 408576
    %v197 = vsel %vm196, %v194, 0.0
    %v198 = vsel %vm196, %v195, 0.0
    %199 = vst [vmem:[#allocation2] sm:$0xff] %v197
    %200 = vst [vmem:[#allocation2 + $0x8] sm:$0xff] %v198
    // Predicated region
    $region38: #{tpu_custom_call.1} parent=1 // pred_check
      _
    $region39: #{tpu_custom_call.1} parent=1 // pred_check_branch
      %202 = sbr.rel (0) target = $region41
    $region40: #{tpu_custom_call.1} parent=1 // pred_region
      %204 = vsyncadd [#allocation3], 0
      %s205 = sshll.u32 [#allocation2], 4
      %s206 = int_to_ptr.vmem [resolvable:$true] %s205
      %s207 = sshll.u32 %s9, 4
      %s208 = int_to_ptr.hbm [resolvable:$true] %s207
      %213 = dma.vmem_to_hbm [thread:$0]  %s206, 256, %s208, [#allocation3], 128, 128, 8
    $region41: #{tpu_custom_call.1} parent=1 // pred_fallthru
      _
    // Predicated region
    $region42: #{tpu_custom_call.1} parent=1 // pred_check
      _
    $region43: #{tpu_custom_call.1} parent=1 // pred_check_branch
      %215 = sbr.rel (0) target = $region45
    $region44: #{tpu_custom_call.1} parent=1 // pred_region
      %217 = dma.done [#allocation3], 256
    $region45: #{tpu_custom_call.1} parent=1 // pred_fallthru
      _
    %218 = vsyncpa [#allocation3], 1

</llo_original>
